<compile_context>
chip_gen: v5e
topology: v5e:2x2
jax: 0.10.0
libtpu: 0.0.40
codegen_flags: <defaults>
</compile_context>

<pallas_src>
import jax
import jax.numpy as jnp
from jax.experimental import pallas as pl
from jax.experimental.pallas import tpu as pltpu


def _pos_encode_kernel(pos_ref, inv_ref, phase_ref, out_ref):
    # pos_ref:   (TILE_N, 1) f32
    # inv_ref:   (1, H) f32   -- inv_freq duplicated across both halves
    # phase_ref: (1, H) f32   -- 0 for the sin half, pi/2 for the cos half
    # out_ref:   (TILE_N, H)
    # One full-width store (lane-dense, unmasked whenever H is a multiple of
    # 128); cos is obtained as sin(x + pi/2) so there is a single sin
    # polynomial path and no cross-lane repack to lane offset H/2.
    sinusoid = pos_ref[...] * inv_ref[...] + phase_ref[...]
    out_ref[...] = jnp.sin(sinusoid).astype(out_ref.dtype)


def _vmem_capacity_bytes():
    """Physical VMEM capacity of the current TPU generation (conservative
    fallback if the query is unavailable)."""
    try:
        info = pltpu.get_tpu_info()
        cap = getattr(info, "vmem_capacity_bytes", None)
        if cap:
            return int(cap)
    except Exception:
        pass
    return 64 << 20  # v7x per-TensorCore VMEM: the smallest of all generations


def _pick_tile_n(n, hidden_size, out_itemsize=4):
    """Pick the N-tile from a VMEM byte budget (not a fixed row cap) and the
    matching vmem_limit_bytes.

    Budget accounts for:
      * output tile: hidden_size * out_itemsize bytes/row, x2 (double buffer)
      * pos tile: the (tile_n, 1) block is lane-padded to (tile_n, 128) in
        VMEM -> 512 bytes/row, x2 (double buffer), even though the DMA only
        moves 4 bytes/row
      * the tiny resident inv/phase tiles.
    """
    vmem_cap = _vmem_capacity_bytes()
    # ~40% of physical VMEM for this kernel's tiles: big multi-MiB tiles to
    # amortize the ~0.35us per-grid-step overhead, with headroom for Mosaic
    # internal scratch on v7x (64 MiB) as well as v5e/v6e (128 MiB).
    budget = int(vmem_cap * 0.4)

    per_row = 2 * (hidden_size * out_itemsize + 128 * 4)
    max_tile = max(8, (budget // per_row) // 8 * 8)

    # At least 2 grid steps when N is non-trivial: feeds both v7x TensorCores
    # and lets the pipeline overlap writeback of tile i-1 with compute of i.
    tile = min(max_tile, max(8, pl.cdiv(n, 2)))
    tile = max(8, (tile // 8) * 8)

    # Explicit scoped-VMEM limit: v5e defaults to 16 MiB scoped VMEM even
    # though the chip has 128 MiB; v7x must stay under 64 MiB physical.
    lane_h = ((hidden_size + 127) // 128) * 128
    const_bytes = 2 * 2 * 8 * lane_h * 4  # inv + phase, padded, double-buffered
    resident = per_row * tile + const_bytes
    vmem_limit = int(min(vmem_cap * 0.9, max(resident + (4 << 20), 16 << 20)))
    return tile, vmem_limit


def positional_encode(pos_seq, hidden_size, out_dtype=jnp.float32):
    """pos_seq: (B, L) float32 -> (B, L, hidden_size) pos_emb.

    out_dtype=jnp.bfloat16 halves HBM writeback (main lever on HBM-write-bound
    v5e) if downstream consumers accept bf16; default f32 matches the PyTorch
    module exactly.
    """
    assert hidden_size % 2 == 0, "hidden_size must be even"
    B, L = pos_seq.shape
    N = B * L
    half = hidden_size // 2

    # Non-learnable buffer, built exactly as in the PyTorch __init__.
    inv_freq = 1.0 / (10000.0 ** (jnp.arange(0.0, hidden_size, 2.0) / hidden_size))
    inv_freq = inv_freq.astype(jnp.float32)
    # cos(x) = sin(x + pi/2): duplicate inv_freq over the full H lanes and add
    # a pi/2 phase to the cos half -> one full-width store in the kernel.
    inv_full = jnp.concatenate([inv_freq, inv_freq]).reshape(1, hidden_size)
    phase = jnp.concatenate(
        [jnp.zeros((half,), jnp.float32), jnp.full((half,), jnp.pi / 2, jnp.float32)]
    ).reshape(1, hidden_size)

    pos_flat = pos_seq.reshape(N, 1).astype(jnp.float32)

    out_itemsize = jnp.dtype(out_dtype).itemsize
    tile_n, vmem_limit = _pick_tile_n(N, hidden_size, out_itemsize)
    grid_n = pl.cdiv(N, tile_n)

    # Streaming kernel: one sin polynomial per output element.  Note sin does
    # NOT map to a single EUP op on TPU -- it is range-reduction + polynomial
    # on the VPU, so v6e/v7x are VALU-bound and v5e is HBM-write-bound.
    cost = pl.CostEstimate(
        flops=2 * N * hidden_size,              # broadcast mul + phase add
        transcendentals=N * hidden_size,        # one sin per output element
        bytes_accessed=N * hidden_size * out_itemsize + N * 4 + 2 * hidden_size * 4,
    )

    # TODO(synk): if production hidden_size is < 128 (like this smoke test's
    # H=32), fold k=128//H rows per output row ((N,H) viewed as (N//k, k*H)) so
    # stores and VPU lanes are fully utilized; skipped because the in-kernel
    # pos lane-expansion needs an interleaved repeat/relayout that is not
    # guaranteed to lower on all TPU generations.
    out = pl.pallas_call(
        _pos_encode_kernel,
        out_shape=jax.ShapeDtypeStruct((N, hidden_size), out_dtype),
        grid_spec=pltpu.PrefetchScalarGridSpec(
            num_scalar_prefetch=0,
            grid=(grid_n,),
            in_specs=[
                pl.BlockSpec((tile_n, 1), lambda i: (i, 0)),
                pl.BlockSpec((1, hidden_size), lambda i: (0, 0)),  # resident
                pl.BlockSpec((1, hidden_size), lambda i: (0, 0)),  # resident
            ],
            out_specs=pl.BlockSpec((tile_n, hidden_size), lambda i: (i, 0)),
        ),
        compiler_params=pltpu.CompilerParams(
            # Tiles are fully independent: shards across v7x's two TensorCores,
            # neutral on single-TC v5e/v6e.
            dimension_semantics=("parallel",),
            vmem_limit_bytes=vmem_limit,
        ),
        cost_estimate=cost,
    )(pos_flat, inv_full, phase)

    return out.reshape(B, L, hidden_size)


if __name__ == "__main__":
    B, L, H = 2, 8, 32
    key = jax.random.PRNGKey(0)
    # Typical usage: a sequence of (possibly fractional / reversed) positions.
    pos_seq = jax.random.uniform(
        key, (B, L), dtype=jnp.float32, minval=0.0, maxval=float(L)
    )

    pos_emb = positional_encode(pos_seq, H)
    jax.block_until_ready(pos_emb)

    # Reference check in plain JAX (same math as the PyTorch forward).
    inv_freq = 1.0 / (10000.0 ** (jnp.arange(0.0, H, 2.0) / H))
    sinusoid = pos_seq.reshape(-1)[:, None] * inv_freq[None, :]
    ref = jnp.concatenate(
        [jnp.sin(sinusoid), jnp.cos(sinusoid)], axis=-1
    ).reshape(B, L, H)
    assert pos_emb.shape == (B, L, H)
    assert jnp.allclose(pos_emb, ref, atol=1e-5, rtol=1e-5)

    print("KERNEL_OK")
</pallas_src>

<mosaic_0001>
module attributes {stable_mosaic.version = 11 : i64} {
  func.func @_pos_encode_kernel(%arg0: i32, %arg1: memref<8x1xf32, #tpu.memory_space<vmem>>, %arg2: memref<1x32xf32, #tpu.memory_space<vmem>>, %arg3: memref<1x32xf32, #tpu.memory_space<vmem>>, %arg4: memref<8x32xf32, #tpu.memory_space<vmem>>) attributes {dimension_semantics = [#tpu.dimension_semantics<parallel>], iteration_bounds = array<i64: 2>, scalar_prefetch = 0 : i64, scratch_operands = 0 : i64, tpu.core_type = #tpu.core_type<tc>, window_params = [{transform_indices = @transform_0, window_bounds = array<i64: 8, 1>}, {pipeline_mode = #tpu.pipeline_mode<synchronous>, transform_indices = @transform_1, window_bounds = array<i64: 1, 32>}, {pipeline_mode = #tpu.pipeline_mode<synchronous>, transform_indices = @transform_2, window_bounds = array<i64: 1, 32>}, {transform_indices = @transform_3, window_bounds = array<i64: 8, 32>}]} {
    %c0 = arith.constant 0 : index
    %c0_0 = arith.constant 0 : index
    %0 = vector.load %arg1[%c0, %c0_0] : memref<8x1xf32, #tpu.memory_space<vmem>>, vector<8x1xf32>
    %c0_1 = arith.constant 0 : index
    %c0_2 = arith.constant 0 : index
    %1 = vector.load %arg2[%c0_1, %c0_2] : memref<1x32xf32, #tpu.memory_space<vmem>>, vector<1x32xf32>
    %2 = vector.broadcast %0 : vector<8x1xf32> to vector<8x32xf32>
    %3 = vector.broadcast %1 : vector<1x32xf32> to vector<8x32xf32>
    %4 = arith.mulf %2, %3 : vector<8x32xf32>
    %c0_3 = arith.constant 0 : index
    %c0_4 = arith.constant 0 : index
    %5 = vector.load %arg3[%c0_3, %c0_4] : memref<1x32xf32, #tpu.memory_space<vmem>>, vector<1x32xf32>
    %6 = vector.broadcast %5 : vector<1x32xf32> to vector<8x32xf32>
    %7 = arith.addf %4, %6 : vector<8x32xf32>
    %8 = math.sin %7 : vector<8x32xf32>
    %c0_5 = arith.constant 0 : index
    %c0_6 = arith.constant 0 : index
    %9 = vector.load %arg4[%c0_5, %c0_6] : memref<8x32xf32, #tpu.memory_space<vmem>>, vector<8x32xf32>
    tpu.vector_store %arg4[%c0_5, %c0_6], %8 {strides = array<i32>} : memref<8x32xf32, #tpu.memory_space<vmem>>, vector<8x32xf32>,
    return
  }
  func.func @transform_0(%arg0: i32) -> (i32, i32) {
    %c0_i32 = arith.constant 0 : i32
    %c0_i32_0 = arith.constant 0 : i32
    return %arg0, %c0_i32 : i32, i32
  }
  func.func @transform_1(%arg0: i32) -> (i32, i32) {
    %c0_i32 = arith.constant 0 : i32
    %c0_i32_0 = arith.constant 0 : i32
    %c0_i32_1 = arith.constant 0 : i32
    return %c0_i32, %c0_i32_0 : i32, i32
  }
  func.func @transform_2(%arg0: i32) -> (i32, i32) {
    %c0_i32 = arith.constant 0 : i32
    %c0_i32_0 = arith.constant 0 : i32
    %c0_i32_1 = arith.constant 0 : i32
    return %c0_i32, %c0_i32_0 : i32, i32
  }
  func.func @transform_3(%arg0: i32) -> (i32, i32) {
    %c0_i32 = arith.constant 0 : i32
    %c0_i32_0 = arith.constant 0 : i32
    return %arg0, %c0_i32 : i32, i32
  }
}

</mosaic_0001>

<llo_original>
// kernel: tpu_custom_call.1
$region0: #{tpu_custom_call.1}
  #allocation0 [shape = 'u32[]', space=smem, size = 0x4, offset = 0x4, fixed_abs, tag = 'smem constant byte address 0x4 - core index']
  #allocation1 [shape = 'u32[72,128]{1,0:T(1,128)}', space=vmem, size = 0x9000, scoped, tag = 'internal scratch']
  %s0 = inlined_call_operand.vmem [shape: f32[16,1], index: 0, kind: input, shape index: {}]
  %s1 = inlined_call_operand.vmem [shape: f32[1,32], index: 1, kind: input, shape index: {}]
  %s2 = inlined_call_operand.vmem [shape: f32[1,32], index: 2, kind: input, shape index: {}]
  %s3 = inlined_call_operand.hbm [shape: f32[16,32], index: 3, kind: output, shape index: {}]
  %s4 = sld [smem:[#allocation0]]
  $region45: #{tpu_custom_call.1} parent=0
    _
  %s6 = ssub.s32 1, %s4
  %s7 = scalar_select 0, %s6, %s4
  $region1: #{tpu_custom_call.1} parent=0
    #allocation2 [shape = 'u8[8192]{0}', space=vmem, size = 0x2000, scoped, tag = 'output window, operand 0']
    #allocation3 [shape = 's32[2]{0}', space=sflag, size = 0x8, scoped, tag = 'scoped memory for tpu_custom_call.1']
    %8 = vsyncpa [#allocation3], 0
    %s9 = scalar_lea.sflag [#allocation3], 1
    %10 = vsyncpa %s9, 0
    loop: start=0, step=1, limit=4
    $region2: #{tpu_custom_call.1} parent=1 // loop_pre_header
      _
    $region3: #{tpu_custom_call.1} parent=1 // loop_header
      %s12 = sphi 0, %s16
      %p13 = scmp.ge.s32.totalorder %s12, 4
      %s22 = sphi 0, %s24
      %s25 = sphi 0, %s22
      %s26 = sphi 0, %s25
      %s42 = sphi 0, %s26
      %s46 = sphi 0, %s46
      %s48 = sphi 0, %s46
      %s49 = sphi 0, %s48
      %s63 = sphi 0, %s49
      %s67 = sphi 0, %s67
      %s69 = sphi 0, %s67
      %s70 = sphi 0, %s69
      %s84 = sphi 0, %s70
      %s90 = sphi 0, %s92
      %s93 = sphi 0, %s90
      %s94 = sphi 0, %s93
      %s110 = sphi 0, %s94
    $region4: #{tpu_custom_call.1} parent=1 // loop_header_branch
      %15 = sbr.rel (%p13) target = $region8
    $region5: #{tpu_custom_call.1} parent=1 // loop_body
      %s17 = ssub.s32 %s12, 1
      %s18 = ssub.s32 %s12, 2
      %s19 = sadd.s32 %s12, 1
      %s20 = ssub.s32 %s12, %s19
      %p21 = scmp.eq.s32.totalorder %s20, 0
      %s23 = sadd.s32 %s22, 1
      %s24 = scalar_select %p21, %s22, %s23
      %p27 = pneg %p21
      %p28 = scmp.eq.s32.totalorder %s12, 1
      %p29 = por %p27, %p28
      %p30 = scmp.ne.s32.totalorder %s22, %s25
      %p31 = scmp.eq.s32.totalorder %s12, 0
      %p32 = por %p30, %p31
      %p33 = scmp.ne.s32.totalorder %s22, %s25
      %p34 = scmp.eq.s32.totalorder %s17, 1
      %p35 = por %p33, %p34
      %p36 = scmp.ne.s32.totalorder %s25, %s26
      %p37 = scmp.eq.s32.totalorder %s17, 0
      %p38 = por %p36, %p37
      %p39 = scmp.ne.s32.totalorder %s25, %s26
      %p40 = scmp.eq.s32.totalorder %s18, 1
      %p41 = por %p39, %p40
      %p43 = scmp.ne.s32.totalorder %s26, %s42
      %p44 = scmp.eq.s32.totalorder %s18, 0
      %p45 = por %p43, %p44
      %s47 = sadd.s32 %s46, 1
      %p50 = scmp.eq.s32.totalorder %s12, 1
      %p51 = scmp.ne.s32.totalorder %s46, %s48
      %p52 = scmp.eq.s32.totalorder %s12, 0
      %p53 = por %p51, %p52
      %p54 = scmp.ne.s32.totalorder %s46, %s48
      %p55 = scmp.eq.s32.totalorder %s17, 1
      %p56 = por %p54, %p55
      %p57 = scmp.ne.s32.totalorder %s48, %s49
      %p58 = scmp.eq.s32.totalorder %s17, 0
      %p59 = por %p57, %p58
      %p60 = scmp.ne.s32.totalorder %s48, %s49
      %p61 = scmp.eq.s32.totalorder %s18, 1
      %p62 = por %p60, %p61
      %p64 = scmp.ne.s32.totalorder %s49, %s63
      %p65 = scmp.eq.s32.totalorder %s18, 0
      %p66 = por %p64, %p65
      %s68 = sadd.s32 %s67, 1
      %p71 = scmp.eq.s32.totalorder %s12, 1
      %p72 = scmp.ne.s32.totalorder %s67, %s69
      %p73 = scmp.eq.s32.totalorder %s12, 0
      %p74 = por %p72, %p73
      %p75 = scmp.ne.s32.totalorder %s67, %s69
      %p76 = scmp.eq.s32.totalorder %s17, 1
      %p77 = por %p75, %p76
      %p78 = scmp.ne.s32.totalorder %s69, %s70
      %p79 = scmp.eq.s32.totalorder %s17, 0
      %p80 = por %p78, %p79
      %p81 = scmp.ne.s32.totalorder %s69, %s70
      %p82 = scmp.eq.s32.totalorder %s18, 1
      %p83 = por %p81, %p82
      %p85 = scmp.ne.s32.totalorder %s70, %s84
      %p86 = scmp.eq.s32.totalorder %s18, 0
      %p87 = por %p85, %p86
      %s88 = ssub.s32 %s12, %s19
      %p89 = scmp.eq.s32.totalorder %s88, 0
      %s91 = sadd.s32 %s90, 1
      %s92 = scalar_select %p89, %s90, %s91
      %p95 = pneg %p89
      %p96 = scmp.eq.s32.totalorder %s12, 1
      %p97 = por %p95, %p96
      %p98 = scmp.ne.s32.totalorder %s90, %s93
      %p99 = scmp.eq.s32.totalorder %s12, 0
      %p100 = por %p98, %p99
      %p101 = scmp.ne.s32.totalorder %s90, %s93
      %p102 = scmp.eq.s32.totalorder %s17, 1
      %p103 = por %p101, %p102
      %p104 = scmp.ne.s32.totalorder %s93, %s94
      %p105 = scmp.eq.s32.totalorder %s17, 0
      %p106 = por %p104, %p105
      %p107 = scmp.ne.s32.totalorder %s93, %s94
      %p108 = scmp.eq.s32.totalorder %s18, 1
      %p109 = por %p107, %p108
      %p111 = scmp.ne.s32.totalorder %s94, %s110
      %p112 = scmp.eq.s32.totalorder %s18, 0
      %p113 = por %p111, %p112
      %p114 = scmp.le.s32.totalorder 1, %s12
      %p115 = scmp.lt.s32.totalorder %s12, 3
      %p116 = pnand %p114, %p115
      %p117 = pneg %p116
      // Predicated region
      $region9: #{tpu_custom_call.1} parent=5 // pred_check
        _
      $region10: #{tpu_custom_call.1} parent=5 // pred_check_branch
        %119 = sbr.rel (%p116) target = $region12
      $region11: #{tpu_custom_call.1} parent=5 // pred_region
        %s120 = ssub.s32 %s12, 1
        // Predicated region
        $region13: #{tpu_custom_call.1} parent=11 // pred_check
          %p121 = pneg %p59
        $region14: #{tpu_custom_call.1} parent=11 // pred_check_branch
          %123 = sbr.rel (%p121) target = $region16
        $region15: #{tpu_custom_call.1} parent=11 // pred_region
          _
        $region16: #{tpu_custom_call.1} parent=11 // pred_fallthru
          _
        // Predicated region
        $region17: #{tpu_custom_call.1} parent=11 // pred_check
          %p124 = pneg %p80
        $region18: #{tpu_custom_call.1} parent=11 // pred_check_branch
          %126 = sbr.rel (%p124) target = $region20
        $region19: #{tpu_custom_call.1} parent=11 // pred_region
          _
        $region20: #{tpu_custom_call.1} parent=11 // pred_fallthru
          _
      $region12: #{tpu_custom_call.1} parent=5 // pred_fallthru
        _
      %p127 = scmp.lt.s32.totalorder %s12, 2
      // Predicated region
      $region21: #{tpu_custom_call.1} parent=5 // pred_check
        %p128 = pneg %p127
      $region22: #{tpu_custom_call.1} parent=5 // pred_check_branch
        %130 = sbr.rel (%p128) target = $region24
      $region23: #{tpu_custom_call.1} parent=5 // pred_region
        // Predicated region
        $region25: #{tpu_custom_call.1} parent=23 // pred_check
          %p131 = pneg %p32
        $region26: #{tpu_custom_call.1} parent=23 // pred_check_branch
          %133 = sbr.rel (%p131) target = $region28
        $region27: #{tpu_custom_call.1} parent=23 // pred_region
          %p134 = scmp.lt.s32.totalorder %s12, 1
          %s135 = scalar_select %p134, %s12, 1
          %s136 = smul.addr %s135, 8
          %s137 = scalar_lea.vmem %s0, %s136
        $region28: #{tpu_custom_call.1} parent=23 // pred_fallthru
          _
      $region24: #{tpu_custom_call.1} parent=5 // pred_fallthru
        _
      %p138 = scmp.le.s32.totalorder 1, %s12
      %p139 = scmp.lt.s32.totalorder %s12, 3
      %p140 = pnand %p138, %p139
      %p141 = pneg %p140
      // Predicated region
      $region29: #{tpu_custom_call.1} parent=5 // pred_check
        _
      $region30: #{tpu_custom_call.1} parent=5 // pred_check_branch
        %143 = sbr.rel (%p140) target = $region32
      $region31: #{tpu_custom_call.1} parent=5 // pred_region
        %s144 = ssub.s32 %s12, 1
        %p145 = scmp.lt.s32.totalorder %s17, 1
        %s146 = scalar_select %p145, %s17, 1
        %s147 = smul.addr %s146, 8
        %s148 = scalar_lea.vmem %s0, %s147
        %p149 = pneg %p38
        %p150 = pneg %p35
        %p151 = pneg %p59
        %p152 = pneg %p56
        %p153 = pneg %p80
        %p154 = pneg %p77
        %p155 = pneg %p106
        %p156 = pneg %p103
        %s157 = sand.u32 %s93, 1
        %s158 = scalar_lea.sflag [#allocation3], %s157
        %s159 = sand.u32 %s93, 1
        %s160 = smul.addr %s159, 8
        %s161 = scalar_lea.vmem [#allocation2], %s160
        %p162 = scmp.lt.s32.totalorder %s17, 1
        %s163 = scalar_select %p162, %s17, 1
        %s164 = smul.addr %s163, 8
        %s165 = scalar_lea.vmem %s0, %s164
        %v166 = vld [vmem:[%s165] sm:$0xff]
        %v167 = vld [vmem:[%s1] sm:$0x1]
        %169 = vset.pattern.permute.xlu0 0
        %170 = vperm.xlu0 %169, %v166
        %v171 = vpop.permute.xlu0 %170
        %v174 = vperm.slane %v167, 0
        %v176 = vmul.f32 %v171, %v174
        %v177 = vld [vmem:[%s2] sm:$0x1]
        %v179 = vperm.slane %v177, 0
        %v181 = vadd.f32 %v176, %v179
        %v182 = vand.u32 2147483647, %v181
        %vm183 = vcmp.le.f32.partialorder %v182, 0.7853982
        %vm184 = vcmp.lt.s32.totalorder %v181, 0
        %v185 = vand.u32 %v181, 2139095040
        %v186 = vshrl.u32 %v185, 23
        %v187 = vsub.s32 %v186, 127
        %v188 = vand.u32 2147483647, %v181
        %v189 = vand.u32 %v188, 8388607
        %v190 = vor.u32 %v189, 8388608
        %v191 = vsub.s32 0, %v190
        %v192 = vadd.s32 %v187, 1
        %vm193 = vcmp.gt.s32.totalorder %v192, 0
        %v194 = vsel %vm193, %v192, 0
        %v195 = vshrl.u32 %v194, 5
        %v196 = vand.u32 %v194, 31
        %v197 = vsub.s32 32, %v196
        %v198 = vshrl.u32 683565275, %v197
        %v199 = vshll.u32 683565275, %v196
        %v200 = vshrl.u32 2475754826, %v197
        %v201 = vor.u32 %v199, %v200
        %v202 = vshll.u32 2475754826, %v196
        %v203 = vshrl.u32 2131351028, %v197
        %v204 = vor.u32 %v202, %v203
        %v205 = vshll.u32 2131351028, %v196
        %v206 = vshrl.u32 2102212464, %v197
        %v207 = vor.u32 %v205, %v206
        %v208 = vshll.u32 2102212464, %v196
        %v209 = vshrl.u32 920167782, %v197
        %v210 = vor.u32 %v208, %v209
        %v211 = vshll.u32 920167782, %v196
        %v212 = vshrl.u32 1326507024, %v197
        %v213 = vor.u32 %v211, %v212
        %vm214 = vcmp.lt.s32.totalorder %v195, 1
        %vm215 = vcmp.lt.s32.totalorder %v195, 2
        %vm216 = vcmp.lt.s32.totalorder %v195, 3
        %vm217 = vcmp.lt.s32.totalorder %v195, 4
        %v218 = vsel %vm214, %v198, %v201
        %v219 = vsel %vm217, %v207, 2102212464
        %v220 = vsel %vm216, %v204, %v219
        %v221 = vsel %vm215, %v218, %v220
        %v222 = vsel %vm214, %v201, %v204
        %v223 = vsel %vm217, %v210, 920167782
        %v224 = vsel %vm216, %v207, %v223
        %v225 = vsel %vm215, %v222, %v224
        %v226 = vsel %vm214, %v204, %v207
        %v227 = vsel %vm217, %v213, 1326507024
        %v228 = vsel %vm216, %v210, %v227
        %v229 = vsel %vm215, %v226, %v228
        %v230 = vshll.u32 %v190, 8
        %v231 = vand.u32 %v230, 65535
        %v232 = vshrl.u32 %v230, 16
        %v233 = vand.u32 %v229, 65535
        %v234 = vshrl.u32 %v229, 16
        %v235 = vmul.u32 %v231, %v233
        %v236 = vmul.u32 %v231, %v234
        %v237 = vmul.u32 %v232, %v233
        %v238 = vmul.u32 %v232, %v234
        %v239 = vshll.u32 %v236, 16
        %v240 = vshrl.u32 %v236, 16
        %v241 = vshll.u32 %v237, 16
        %v242 = vshrl.u32 %v237, 16
        %vm243 = vc.u32 %v235, %v239
        %v244 = vsel %vm243, 1, 0
        %v245 = vadd.s32 %v235, %v239
        %v246 = vadd.s32 %v238, %v244
        %vm247 = vc.u32 %v245, %v241
        %v248 = vsel %vm247, 1, 0
        %v249 = vadd.s32 %v245, %v241
        %v250 = vadd.s32 %v246, %v248
        %v251 = vadd.s32 %v250, %v240
        %v252 = vadd.s32 %v251, %v242
        %v253 = vand.u32 %v230, 65535
        %v254 = vshrl.u32 %v230, 16
        %v255 = vand.u32 %v225, 65535
        %v256 = vshrl.u32 %v225, 16
        %v257 = vmul.u32 %v253, %v255
        %v258 = vmul.u32 %v253, %v256
        %v259 = vmul.u32 %v254, %v255
        %v260 = vmul.u32 %v254, %v256
        %v261 = vshll.u32 %v258, 16
        %v262 = vshrl.u32 %v258, 16
        %v263 = vshll.u32 %v259, 16
        %v264 = vshrl.u32 %v259, 16
        %vm265 = vc.u32 %v257, %v261
        %v266 = vsel %vm265, 1, 0
        %v267 = vadd.s32 %v257, %v261
        %v268 = vadd.s32 %v260, %v266
        %vm269 = vc.u32 %v267, %v263
        %v270 = vsel %vm269, 1, 0
        %v271 = vadd.s32 %v267, %v263
        %v272 = vadd.s32 %v268, %v270
        %v273 = vadd.s32 %v272, %v262
        %v274 = vadd.s32 %v273, %v264
        %v275 = vmul.u32 %v230, %v221
        %v276 = vadd.s32 %v252, %v271
        %vm277 = vc.u32 %v252, %v271
        %v278 = vadd.s32 %v274, 1
        %v279 = vsel %vm277, %v278, %v274
        %v280 = vadd.s32 %v275, %v279
        %v281 = vadd.s32 %v280, 536870912
        %v282 = vshrl.u32 %v281, 30
        %v283 = vshll.u32 %v282, 30
        %v284 = vsub.s32 %v280, %v283
        %vm285 = vcmp.lt.s32.totalorder %v284, 0
        %v286 = vsub.s32 0, %v284
        %v287 = vsel %vm285, %v286, %v284
        %v288 = vclz %v287
        %v289 = vsub.s32 %v288, 2
        %vm290 = vcmp.gt.s32.totalorder 0, %v289
        %v291 = vsel %vm290, 0, %v289
        %v292 = vsub.s32 32, %v291
        %v293 = vshll.u32 %v284, %v291
        %v294 = vshrl.u32 %v276, %v292
        %v295 = vor.u32 %v293, %v294
        %v296 = vsub.s32 4294967266, %v291
        %v297 = vadd.s32 %v296, 127
        %v298 = vshll.u32 %v297, 23
        %v299 = vor.u32 4788187, %v298
        %v300 = vand.u32 2147483647, %v299
        %v302 = vcvt.s32.f32 %v295
        %v303 = vmul.f32 %v302, %v300
        %v304 = vxor.u32 %v303, 2147483648
        %v305 = vsel %vm184, %v304, %v303
        %v306 = vsub.s32 4, %v282
        %v307 = vsel %vm184, %v306, %v282
        %v308 = vsel %vm183, %v181, %v305
        %v309 = vsel %vm183, 0, %v307
        %v310 = vmul.f32 %v308, %v308
        %v311 = vmul.f32 %v310, -0.001358992
        %v312 = vadd.f32 %v311, 0.041655596
        %v313 = vmul.f32 %v310, %v312
        %v314 = vadd.f32 %v313, -0.4999988
        %v315 = vmul.f32 %v310, %v314
        %v316 = vadd.f32 1.0, %v315
        %v317 = vmul.f32 %v308, %v308
        %v318 = vmul.f32 %v317, -0.00019511016
        %v319 = vadd.f32 %v318, 0.008332121
        %v320 = vmul.f32 %v317, %v319
        %v321 = vadd.f32 %v320, -0.16666654
        %v322 = vmul.f32 %v317, %v321
        %v323 = vadd.f32 %v322, 1.0
        %v324 = vmul.f32 %v323, %v308
        %vm325 = vweird.f32 %v181
        %v326 = vadd.s32 %v309, 3
        %v327 = vand.u32 %v326, 3
        %vm328 = vcmp.lt.s32.totalorder %v327, 2
        %vm329 = vcmp.eq.s32.totalorder %v327, 0
        %v330 = vxor.u32 %v324, 2147483648
        %v331 = vsel %vm329, %v316, %v330
        %vm332 = vcmp.eq.s32.totalorder %v327, 2
        %v333 = vxor.u32 %v316, 2147483648
        %v334 = vsel %vm332, %v333, %v324
        %v335 = vsel %vm328, %v331, %v334
        %v336 = vsel %vm325, nan, %v335
        %vm337 = vcmask 261120
        %338 = vst.msk [vmem:[%s161] sm:$0xff] %vm337, %v336
        %s339 = sand.u32 %s93, 1
        %s340 = scalar_lea.sflag [#allocation3], %s339
        %s341 = sand.u32 %s93, 1
        %s342 = smul.addr %s341, 8
        %s343 = scalar_lea.vmem [#allocation2], %s342
        // Predicated region
        $region33: #{tpu_custom_call.1} parent=31 // pred_check
          %p344 = pneg %p103
        $region34: #{tpu_custom_call.1} parent=31 // pred_check_branch
          %346 = sbr.rel (%p344) target = $region36
        $region35: #{tpu_custom_call.1} parent=31 // pred_region
          %348 = vsyncadd %s340, 0
          %s349 = smul.addr %s17, 8
          %s350 = scalar_lea.hbm %s3, %s349
          %s352 = sshll.u32 %s343, 4
          %s353 = int_to_ptr.vmem [resolvable:$true] %s352
          %s354 = sshll.u32 %s350, 4
          %s355 = int_to_ptr.hbm [resolvable:$true] %s354
          %357 = dma.vmem_to_hbm [thread:$0]  %s353, 128, %s355, %s340
        $region36: #{tpu_custom_call.1} parent=31 // pred_fallthru
          _
      $region32: #{tpu_custom_call.1} parent=5 // pred_fallthru
        _
      %p358 = scmp.le.s32.totalorder 2, %s12
      // Predicated region
      $region37: #{tpu_custom_call.1} parent=5 // pred_check
        %p359 = pneg %p358
      $region38: #{tpu_custom_call.1} parent=5 // pred_check_branch
        %361 = sbr.rel (%p359) target = $region40
      $region39: #{tpu_custom_call.1} parent=5 // pred_region
        %s362 = ssub.s32 %s12, 2
        // Predicated region
        $region41: #{tpu_custom_call.1} parent=39 // pred_check
          %p363 = pneg %p109
        $region42: #{tpu_custom_call.1} parent=39 // pred_check_branch
          %365 = sbr.rel (%p363) target = $region44
        $region43: #{tpu_custom_call.1} parent=39 // pred_region
          %s366 = sand.u32 %s94, 1
          %s367 = scalar_lea.sflag [#allocation3], %s366
          %s368 = sand.u32 %s94, 1
          %s369 = smul.addr %s368, 8
          %s370 = scalar_lea.vmem [#allocation2], %s369
          %372 = dma.done %s367, 128
        $region44: #{tpu_custom_call.1} parent=39 // pred_fallthru
          _
      $region40: #{tpu_custom_call.1} parent=5 // pred_fallthru
        _
    $region6: #{tpu_custom_call.1} parent=1 // loop_footer
      %s16 = sadd.s32 1, %s12
    $region7: #{tpu_custom_call.1} parent=1 // loop_footer_branch
      %11 = sbr.rel target = $region3
    $region8: #{tpu_custom_call.1} parent=1 // loop_exit
      _
    %373 = vsyncpa [#allocation3], 1
    %s374 = scalar_lea.sflag [#allocation3], 1
    %375 = vsyncpa %s374, 1

</llo_original>
